<compile_context>
chip_gen: v5e
topology: v5e:2x2
jax: 0.10.0
libtpu: 0.0.40
codegen_flags: <defaults>
</compile_context>

<pallas_src>
import functools
import math

import jax
import jax.numpy as jnp
from jax.experimental import pallas as pl
from jax.experimental.pallas import tpu as pltpu


def _round_up(n, m):
    return ((n + m - 1) // m) * m


def _choose_tiles(batch, tb_max, min_tiles):
    """Pick (tile_rows, n_tiles) with tile_rows % 8 == 0 and minimal padding."""
    n_tiles = max(pl.cdiv(batch, tb_max), min_tiles)
    tb = _round_up(pl.cdiv(batch, n_tiles), 8)
    n_tiles = pl.cdiv(batch, tb)          # drop empty trailing tiles
    return tb, n_tiles


def critic_mlp_kernel(x_ref, w1_ref, w2_ref, w3_ref, w4_ref, o_ref):
    dt = x_ref.dtype                       # compute dtype (f32, or bf16 opt-in)
    h = x_ref[...]
    for w_ref in (w1_ref, w2_ref, w3_ref):  # unrolled at trace time
        h = jnp.tanh(
            jnp.dot(h, w_ref[...], preferred_element_type=jnp.float32)
        ).astype(dt)
    o_ref[...] = jnp.dot(
        h, w4_ref[...], preferred_element_type=jnp.float32
    ).astype(o_ref.dtype)


def critic_forward(x, w1, w2, w3, w4, *, tb_max=2048, min_tiles=2,
                   use_bf16=False):
    """x: (B, in_shape); w*: (fan_in, fan_out), pre-transposed. -> (B, out_shape) f32."""
    B, in_dim = x.shape
    out_dim = w4.shape[1]

    compute_dtype = jnp.bfloat16 if use_bf16 else jnp.float32
    x = x.astype(compute_dtype)            # mirrors x.float() (bf16 only if asked)
    w1, w2, w3, w4 = (w.astype(compute_dtype) for w in (w1, w2, w3, w4))

    tb, n_tiles = _choose_tiles(B, tb_max, min_tiles)
    b_pad = tb * n_tiles
    if b_pad != B:
        x = jnp.pad(x, ((0, b_pad - B), (0, 0)))   # tanh(0)=0 rows, sliced off

    out = pl.pallas_call(
        critic_mlp_kernel,
        out_shape=jax.ShapeDtypeStruct((b_pad, out_dim), jnp.float32),
        grid_spec=pltpu.PrefetchScalarGridSpec(
            num_scalar_prefetch=0,
            grid=(n_tiles,),
            in_specs=[
                # Activations: tiled over batch, double-buffered by Pallas.
                pl.BlockSpec((tb, in_dim), lambda i: (i, 0)),
                # Weights: full-array blocks, constant index_map -> fetched
                # once, VMEM-resident across all batch tiles.
                pl.BlockSpec(w1.shape, lambda i: (0, 0)),
                pl.BlockSpec(w2.shape, lambda i: (0, 0)),
                pl.BlockSpec(w3.shape, lambda i: (0, 0)),
                pl.BlockSpec(w4.shape, lambda i: (0, 0)),
            ],
            # Unpadded (tb, out_dim) output: last dim equals the full array
            # dim, so the (8,128) rule is satisfied; writeback bytes stay tiny.
            out_specs=pl.BlockSpec((tb, out_dim), lambda i: (i, 0)),
        ),
        compiler_params=pltpu.CompilerParams(
            dimension_semantics=("parallel",)),
    )(x, w1, w2, w3, w4)
    return out[:B]


critic_forward_jit = jax.jit(
    critic_forward, static_argnames=("tb_max", "min_tiles", "use_bf16"))


def xavier_uniform(key, fan_in, fan_out, gain):
    # Matches torch.nn.init.xavier_uniform_ on a (fan_out, fan_in) weight;
    # produced directly in the transposed (fan_in, fan_out) layout.
    bound = gain * math.sqrt(6.0 / (fan_in + fan_out))
    return jax.random.uniform(
        key, (fan_in, fan_out), minval=-bound, maxval=bound, dtype=jnp.float32
    )


def init_params(key, in_shape, out_shape):
    gain = 1.0 / math.sqrt(2.0)
    k1, k2, k3, k4 = jax.random.split(key, 4)
    w1 = xavier_uniform(k1, in_shape, 64, gain)
    w2 = xavier_uniform(k2, 64, 64, gain)
    w3 = xavier_uniform(k3, 64, 32, gain)
    w4 = xavier_uniform(k4, 32, out_shape, gain)
    return w1, w2, w3, w4


def _reference(x, w1, w2, w3, w4):
    h = jnp.tanh(x @ w1)
    h = jnp.tanh(h @ w2)
    h = jnp.tanh(h @ w3)
    return h @ w4


if __name__ == "__main__":
    # LunarLander-v2: observation dim = 8, action_space.n = 4 (as in the script).
    in_shape, out_shape = 8, 4

    key = jax.random.PRNGKey(0)
    kx1, kx2, kp = jax.random.split(key, 3)
    w1, w2, w3, w4 = init_params(kp, in_shape, out_shape)

    # Small deployed-shape batch (collapses to a single grid step).
    x_small = jax.random.normal(kx1, (8, in_shape), dtype=jnp.float32)
    y_small = critic_forward_jit(x_small, w1, w2, w3, w4)
    jax.block_until_ready(y_small)
    assert y_small.shape == (8, out_shape)
    assert jnp.allclose(y_small, _reference(x_small, w1, w2, w3, w4),
                        atol=1e-5, rtol=1e-5)

    # Larger batch: adaptive tiling -> 2 tiles of 152 rows (4 padded rows),
    # "parallel" grid axis so both v7x TensorCores get a tile.
    x_big = jax.random.normal(kx2, (300, in_shape), dtype=jnp.float32)
    y_big = critic_forward_jit(x_big, w1, w2, w3, w4)
    jax.block_until_ready(y_big)
    assert y_big.shape == (300, out_shape)
    assert jnp.allclose(y_big, _reference(x_big, w1, w2, w3, w4),
                        atol=1e-5, rtol=1e-5)

    print("KERNEL_OK")
</pallas_src>

<mosaic_0001>
module attributes {stable_mosaic.version = 11 : i64} {
  func.func @critic_mlp_kernel(%arg0: i32, %arg1: memref<8x8xf32, #tpu.memory_space<vmem>>, %arg2: memref<8x64xf32, #tpu.memory_space<vmem>>, %arg3: memref<64x64xf32, #tpu.memory_space<vmem>>, %arg4: memref<64x32xf32, #tpu.memory_space<vmem>>, %arg5: memref<32x4xf32, #tpu.memory_space<vmem>>, %arg6: memref<8x4xf32, #tpu.memory_space<vmem>>) attributes {dimension_semantics = [#tpu.dimension_semantics<parallel>], iteration_bounds = array<i64: 1>, scalar_prefetch = 0 : i64, scratch_operands = 0 : i64, tpu.core_type = #tpu.core_type<tc>, window_params = [{transform_indices = @transform_0, window_bounds = array<i64: 8, 8>}, {pipeline_mode = #tpu.pipeline_mode<synchronous>, transform_indices = @transform_1, window_bounds = array<i64: 8, 64>}, {pipeline_mode = #tpu.pipeline_mode<synchronous>, transform_indices = @transform_2, window_bounds = array<i64: 64, 64>}, {pipeline_mode = #tpu.pipeline_mode<synchronous>, transform_indices = @transform_3, window_bounds = array<i64: 64, 32>}, {pipeline_mode = #tpu.pipeline_mode<synchronous>, transform_indices = @transform_4, window_bounds = array<i64: 32, 4>}, {transform_indices = @transform_5, window_bounds = array<i64: 8, 4>}]} {
    %c0 = arith.constant 0 : index
    %c0_0 = arith.constant 0 : index
    %0 = vector.load %arg1[%c0, %c0_0] : memref<8x8xf32, #tpu.memory_space<vmem>>, vector<8x8xf32>
    %c0_1 = arith.constant 0 : index
    %c0_2 = arith.constant 0 : index
    %1 = vector.load %arg2[%c0_1, %c0_2] : memref<8x64xf32, #tpu.memory_space<vmem>>, vector<8x64xf32>
    %cst = arith.constant dense<0.000000e+00> : vector<8x64xf32>
    %2 = tpu.matmul %0, %1, %cst {dimension_numbers = #tpu.dot_dimension_numbers<[1], [0], [0], [1], [0, 0, 1, 1], [], []>} : vector<8x8xf32>, vector<8x64xf32>, vector<8x64xf32> -> vector<8x64xf32>
    %3 = math.tanh %2 : vector<8x64xf32>
    %c0_3 = arith.constant 0 : index
    %c0_4 = arith.constant 0 : index
    %4 = vector.load %arg3[%c0_3, %c0_4] : memref<64x64xf32, #tpu.memory_space<vmem>>, vector<64x64xf32>
    %cst_5 = arith.constant dense<0.000000e+00> : vector<8x64xf32>
    %5 = tpu.matmul %3, %4, %cst_5 {dimension_numbers = #tpu.dot_dimension_numbers<[1], [0], [0], [1], [0, 0, 1, 1], [], []>} : vector<8x64xf32>, vector<64x64xf32>, vector<8x64xf32> -> vector<8x64xf32>
    %6 = math.tanh %5 : vector<8x64xf32>
    %c0_6 = arith.constant 0 : index
    %c0_7 = arith.constant 0 : index
    %7 = vector.load %arg4[%c0_6, %c0_7] : memref<64x32xf32, #tpu.memory_space<vmem>>, vector<64x32xf32>
    %cst_8 = arith.constant dense<0.000000e+00> : vector<8x32xf32>
    %8 = tpu.matmul %6, %7, %cst_8 {dimension_numbers = #tpu.dot_dimension_numbers<[1], [0], [0], [1], [0, 0, 1, 1], [], []>} : vector<8x64xf32>, vector<64x32xf32>, vector<8x32xf32> -> vector<8x32xf32>
    %9 = math.tanh %8 : vector<8x32xf32>
    %c0_9 = arith.constant 0 : index
    %c0_10 = arith.constant 0 : index
    %10 = vector.load %arg5[%c0_9, %c0_10] : memref<32x4xf32, #tpu.memory_space<vmem>>, vector<32x4xf32>
    %cst_11 = arith.constant dense<0.000000e+00> : vector<8x4xf32>
    %11 = tpu.matmul %9, %10, %cst_11 {dimension_numbers = #tpu.dot_dimension_numbers<[1], [0], [0], [1], [0, 0, 1, 1], [], []>} : vector<8x32xf32>, vector<32x4xf32>, vector<8x4xf32> -> vector<8x4xf32>
    %c0_12 = arith.constant 0 : index
    %c0_13 = arith.constant 0 : index
    %12 = vector.load %arg6[%c0_12, %c0_13] : memref<8x4xf32, #tpu.memory_space<vmem>>, vector<8x4xf32>
    tpu.vector_store %arg6[%c0_12, %c0_13], %11 {strides = array<i32>} : memref<8x4xf32, #tpu.memory_space<vmem>>, vector<8x4xf32>,
    return
  }
  func.func @transform_0(%arg0: i32) -> (i32, i32) {
    %c0_i32 = arith.constant 0 : i32
    %c0_i32_0 = arith.constant 0 : i32
    return %arg0, %c0_i32 : i32, i32
  }
  func.func @transform_1(%arg0: i32) -> (i32, i32) {
    %c0_i32 = arith.constant 0 : i32
    %c0_i32_0 = arith.constant 0 : i32
    %c0_i32_1 = arith.constant 0 : i32
    return %c0_i32, %c0_i32_0 : i32, i32
  }
  func.func @transform_2(%arg0: i32) -> (i32, i32) {
    %c0_i32 = arith.constant 0 : i32
    %c0_i32_0 = arith.constant 0 : i32
    %c0_i32_1 = arith.constant 0 : i32
    return %c0_i32, %c0_i32_0 : i32, i32
  }
  func.func @transform_3(%arg0: i32) -> (i32, i32) {
    %c0_i32 = arith.constant 0 : i32
    %c0_i32_0 = arith.constant 0 : i32
    %c0_i32_1 = arith.constant 0 : i32
    return %c0_i32, %c0_i32_0 : i32, i32
  }
  func.func @transform_4(%arg0: i32) -> (i32, i32) {
    %c0_i32 = arith.constant 0 : i32
    %c0_i32_0 = arith.constant 0 : i32
    %c0_i32_1 = arith.constant 0 : i32
    return %c0_i32, %c0_i32_0 : i32, i32
  }
  func.func @transform_5(%arg0: i32) -> (i32, i32) {
    %c0_i32 = arith.constant 0 : i32
    %c0_i32_0 = arith.constant 0 : i32
    return %arg0, %c0_i32 : i32, i32
  }
}

</mosaic_0001>

<llo_original>
// kernel: critic_forward.1
$region0: #{critic_forward.1}
  #allocation0 [shape = 'u32[]', space=smem, size = 0x4, offset = 0x4, fixed_abs, tag = 'smem constant byte address 0x4 - core index']
  #allocation1 [shape = 'u32[72,128]{1,0:T(1,128)}', space=vmem, size = 0x9000, scoped, tag = 'internal scratch']
  %s0 = inlined_call_operand.vmem [shape: f32[8,8], index: 0, kind: input, shape index: {}]
  %s1 = inlined_call_operand.vmem [shape: f32[8,64], index: 1, kind: input, shape index: {}]
  %s2 = inlined_call_operand.vmem [shape: f32[64,64], index: 2, kind: input, shape index: {}]
  %s3 = inlined_call_operand.vmem [shape: f32[64,32], index: 3, kind: input, shape index: {}]
  %s4 = inlined_call_operand.vmem [shape: f32[32,4], index: 4, kind: input, shape index: {}]
  %s5 = inlined_call_operand.vmem [shape: f32[8,4], index: 5, kind: output, shape index: {}]
  %s6 = sld [smem:[#allocation0]]
  $region30: #{critic_forward.1} parent=0
    _
  %s8 = ssub.s32 1, %s6
  %s9 = scalar_select 0, %s8, %s6
  // Predicated region
  $region2: #{critic_forward.1} parent=0 // pred_check
    _
  $region3: #{critic_forward.1} parent=0 // pred_check_branch
    %11 = sbr.rel (0) target = $region5
  $region4: #{critic_forward.1} parent=0 // pred_region
    _
  $region5: #{critic_forward.1} parent=0 // pred_fallthru
    _
  // Predicated region
  $region6: #{critic_forward.1} parent=0 // pred_check
    _
  $region7: #{critic_forward.1} parent=0 // pred_check_branch
    %13 = sbr.rel (0) target = $region9
  $region8: #{critic_forward.1} parent=0 // pred_region
    _
  $region9: #{critic_forward.1} parent=0 // pred_fallthru
    _
  // Predicated region
  $region10: #{critic_forward.1} parent=0 // pred_check
    _
  $region11: #{critic_forward.1} parent=0 // pred_check_branch
    %15 = sbr.rel (0) target = $region13
  $region12: #{critic_forward.1} parent=0 // pred_region
    _
  $region13: #{critic_forward.1} parent=0 // pred_fallthru
    _
  // Predicated region
  $region14: #{critic_forward.1} parent=0 // pred_check
    _
  $region15: #{critic_forward.1} parent=0 // pred_check_branch
    %17 = sbr.rel (0) target = $region17
  $region16: #{critic_forward.1} parent=0 // pred_region
    _
  $region17: #{critic_forward.1} parent=0 // pred_fallthru
    _
  // Predicated region
  $region18: #{critic_forward.1} parent=0 // pred_check
    _
  $region19: #{critic_forward.1} parent=0 // pred_check_branch
    %19 = sbr.rel (0) target = $region21
  $region20: #{critic_forward.1} parent=0 // pred_region
    _
  $region21: #{critic_forward.1} parent=0 // pred_fallthru
    _
  %v20 = vld [vmem:[%s0] sm:$0xff]
  %v21 = vld [vmem:[%s1] sm:$0xff]
  %vm22 = vcmask 64512
  %v24 = vsel %vm22, %v20, 0
  %26 = vmatpush.msra.mxu0 0.0
  %27 = vmatpush.msra.mxu0 0.0
  %28 = vmatpush.msra.mxu0 0.0
  %29 = vmatpush.msra.mxu0 0.0
  %30 = vmatpush.msra.mxu0 0.0
  %31 = vmatpush.msra.mxu0 0.0
  %32 = vmatpush.msra.mxu0 0.0
  %33 = vmatpush.msra.mxu0 0.0
  %34 = vmatpush.msra.mxu0 0.0
  %35 = vmatpush.msra.mxu0 0.0
  %36 = vmatpush.msra.mxu0 0.0
  %37 = vmatpush.msra.mxu0 0.0
  %38 = vmatpush.msra.mxu0 0.0
  %39 = vmatpush.msra.mxu0 0.0
  %40 = vmatpush.msra.mxu0 0.0
  %41 = vmatpush.msra.mxu0 %v21
  %42 = vmatmul.f32.gmra.mxu0 %v24
  %v43 = vpop.f32.mrf.mxu0
  %v44 = vadd.f32 0.0, %v43
  %45 = vdwg.mxu0
  %v46 = vtanh.pop %v44
  %v47 = vld [vmem:[%s2] sm:$0xff]
  %v48 = vld [vmem:[%s2 + $0x8] sm:$0xff]
  %v49 = vld [vmem:[%s2 + $0x10] sm:$0xff]
  %v50 = vld [vmem:[%s2 + $0x18] sm:$0xff]
  %v51 = vld [vmem:[%s2 + $0x20] sm:$0xff]
  %v52 = vld [vmem:[%s2 + $0x28] sm:$0xff]
  %v53 = vld [vmem:[%s2 + $0x30] sm:$0xff]
  %v54 = vld [vmem:[%s2 + $0x38] sm:$0xff]
  %vm55 = vcmask 523264
  %v57 = vsel %vm55, %v46, 0
  %59 = vmatpush.msra.mxu0 0.0
  %60 = vmatpush.msra.mxu0 0.0
  %61 = vmatpush.msra.mxu0 0.0
  %62 = vmatpush.msra.mxu0 0.0
  %63 = vmatpush.msra.mxu0 0.0
  %64 = vmatpush.msra.mxu0 0.0
  %65 = vmatpush.msra.mxu0 0.0
  %66 = vmatpush.msra.mxu0 0.0
  %67 = vmatpush.msra.mxu0 %v54
  %68 = vmatpush.msra.mxu0 %v53
  %69 = vmatpush.msra.mxu0 %v52
  %70 = vmatpush.msra.mxu0 %v51
  %71 = vmatpush.msra.mxu0 %v50
  %72 = vmatpush.msra.mxu0 %v49
  %73 = vmatpush.msra.mxu0 %v48
  %74 = vmatpush.msra.mxu0 %v47
  %75 = vmatmul.f32.gmra.mxu0 %v57
  %v76 = vpop.f32.mrf.mxu0
  %v77 = vadd.f32 0.0, %v76
  %78 = vdwg.mxu0
  %v79 = vtanh.pop %v77
  %v80 = vld [vmem:[%s3] sm:$0xff]
  %v81 = vld [vmem:[%s3 + $0x8] sm:$0xff]
  %v82 = vld [vmem:[%s3 + $0x10] sm:$0xff]
  %v83 = vld [vmem:[%s3 + $0x18] sm:$0xff]
  %v84 = vld [vmem:[%s3 + $0x20] sm:$0xff]
  %v85 = vld [vmem:[%s3 + $0x28] sm:$0xff]
  %v86 = vld [vmem:[%s3 + $0x30] sm:$0xff]
  %v87 = vld [vmem:[%s3 + $0x38] sm:$0xff]
  %v89 = vsel %vm55, %v79, 0
  %91 = vmatpush.msra.mxu0 0.0
  %92 = vmatpush.msra.mxu0 0.0
  %93 = vmatpush.msra.mxu0 0.0
  %94 = vmatpush.msra.mxu0 0.0
  %95 = vmatpush.msra.mxu0 0.0
  %96 = vmatpush.msra.mxu0 0.0
  %97 = vmatpush.msra.mxu0 0.0
  %98 = vmatpush.msra.mxu0 0.0
  %99 = vmatpush.msra.mxu0 %v87
  %100 = vmatpush.msra.mxu0 %v86
  %101 = vmatpush.msra.mxu0 %v85
  %102 = vmatpush.msra.mxu0 %v84
  %103 = vmatpush.msra.mxu0 %v83
  %104 = vmatpush.msra.mxu0 %v82
  %105 = vmatpush.msra.mxu0 %v81
  %106 = vmatpush.msra.mxu0 %v80
  %107 = vmatmul.f32.gmra.mxu0 %v89
  %v108 = vpop.f32.mrf.mxu0
  %v109 = vadd.f32 0.0, %v108
  %110 = vdwg.mxu0
  %v111 = vtanh.pop %v109
  %v112 = vld [vmem:[%s4] sm:$0xff]
  %v113 = vld [vmem:[%s4 + $0x8] sm:$0xff]
  %v114 = vld [vmem:[%s4 + $0x10] sm:$0xff]
  %v115 = vld [vmem:[%s4 + $0x18] sm:$0xff]
  %vm116 = vcmask 261120
  %v118 = vsel %vm116, %v111, 0
  %120 = vmatpush.msra.mxu0 0.0
  %121 = vmatpush.msra.mxu0 0.0
  %122 = vmatpush.msra.mxu0 0.0
  %123 = vmatpush.msra.mxu0 0.0
  %124 = vmatpush.msra.mxu0 0.0
  %125 = vmatpush.msra.mxu0 0.0
  %126 = vmatpush.msra.mxu0 0.0
  %127 = vmatpush.msra.mxu0 0.0
  %128 = vmatpush.msra.mxu0 0.0
  %129 = vmatpush.msra.mxu0 0.0
  %130 = vmatpush.msra.mxu0 0.0
  %131 = vmatpush.msra.mxu0 0.0
  %132 = vmatpush.msra.mxu0 %v115
  %133 = vmatpush.msra.mxu0 %v114
  %134 = vmatpush.msra.mxu0 %v113
  %135 = vmatpush.msra.mxu0 %v112
  %136 = vmatmul.f32.gmra.mxu0 %v118
  %v137 = vpop.f32.mrf.mxu0
  %v138 = vadd.f32 0.0, %v137
  %139 = vdwg.mxu0
  %vm140 = vcmask 31744
  %141 = vst.msk [vmem:[%s5] sm:$0xff] %vm140, %v138
  // Predicated region
  $region22: #{critic_forward.1} parent=0 // pred_check
    _
  $region23: #{critic_forward.1} parent=0 // pred_check_branch
    %143 = sbr.rel (0) target = $region25
  $region24: #{critic_forward.1} parent=0 // pred_region
    _
  $region25: #{critic_forward.1} parent=0 // pred_fallthru
    _
  // Predicated region
  $region26: #{critic_forward.1} parent=0 // pred_check
    _
  $region27: #{critic_forward.1} parent=0 // pred_check_branch
    %145 = sbr.rel (0) target = $region29
  $region28: #{critic_forward.1} parent=0 // pred_region
    _
  $region29: #{critic_forward.1} parent=0 // pred_fallthru
    _

</llo_original>
